<compile_context>
chip_gen: v7x
topology: tpu7x:2x2x1
jax: 0.10.0
libtpu: 0.0.40
codegen_flags: <defaults>
</compile_context>

<pallas_src>
import functools

import jax
import jax.numpy as jnp
from jax import lax
from jax.experimental import pallas as pl
from jax.experimental.pallas import tpu as pltpu

_LANE = 128
_TARGET_BLOCK_ELEMS = 1024 * 1024  # ~4 MiB per f32 input block


def _elementwise_loss(d, mode):
    """Elementwise loss from diff d = logits - targets (f32)."""
    ad = jnp.abs(d)
    if mode == "l1_loss":
        return ad
    if mode == "l2_loss":
        return d * d
    if mode == "huber_loss":
        beta = 1.0
        return jnp.where(ad < beta, 0.5 * d * d / beta, ad - 0.5 * beta)
    if mode in ("focal_l1_loss", "focal_l2_loss"):
        beta, gamma = 0.2, 1.0  # semilearn defaults (activate='sigmoid')
        # 2*sigmoid(beta*|d|) - 1 == tanh(0.5*beta*|d|): one EUP push per
        # element instead of exp + reciprocal (matters on v7x at 3.2 TB/s).
        factor = jnp.tanh((0.5 * beta) * ad)
        if gamma != 1.0:  # gamma == 1 -> skip pow (log+exp on the EUP)
            factor = factor ** gamma
        base = ad if mode == "focal_l1_loss" else d * d
        return base * factor
    raise ValueError(mode)


def _reduce_kernel(x_ref, t_ref, o_ref, *, mode, rows, block_rows,
                   steps_per_split, need_mask):
    """Accumulate per-lane loss sums into a resident (8, C) output tile."""
    s = pl.program_id(0)   # core-split axis ('parallel')
    i = pl.program_id(1)   # reduction axis ('arbitrary')

    @pl.when(i == 0)
    def _():
        o_ref[...] = jnp.zeros_like(o_ref)

    d = x_ref[...].astype(jnp.float32) - t_ref[...].astype(jnp.float32)
    elem = _elementwise_loss(d, mode)

    if need_mask:
        gb = s * steps_per_split + i  # logical (unclamped) block index
        row_ids = gb * block_rows + lax.broadcasted_iota(jnp.int32, elem.shape, 0)
        # NOTE: keep this as jnp.where (select), NOT `elem * mask`: out-of-range
        # rows hold values computed from uninitialized/stale VMEM, and NaN * 0
        # would poison the sum, while select cleanly drops the unselected value.
        elem = jnp.where(row_ids < rows, elem, 0.0)

    if block_rows % 8 == 0:
        # Full (8, C)-tile accumulate: the reshape is sublane-aligned (free),
        # the axis-0 reduce is pure VPU adds, and the store is an unmasked
        # full-tile store -- no per-step XLU reduce, no vst.msk.
        o_ref[...] += jnp.sum(
            elem.reshape(block_rows // 8, 8, elem.shape[-1]), axis=0)
    else:
        # Rare path (single block whose row count is not a multiple of 8).
        o_ref[0:1, :] += jnp.sum(elem, axis=0, keepdims=True)


def _elementwise_kernel(x_ref, t_ref, o_ref, *, mode):
    """reduction='none': pure elementwise loss."""
    d = x_ref[...].astype(jnp.float32) - t_ref[...].astype(jnp.float32)
    o_ref[...] = _elementwise_loss(d, mode).astype(o_ref.dtype)


def _flatten_aligned(x, t, n_aligned):
    """Flatten both inputs to a lane-dense (rows, C) slab over the aligned prefix."""
    xf = x.reshape(-1)
    tf = t.reshape(-1)
    if n_aligned != xf.size:
        xf = xf[:n_aligned]
        tf = tf[:n_aligned]
    lanes = _LANE
    for c in (1024, 512, 256):
        if n_aligned % c == 0:
            lanes = c
            break
    rows = n_aligned // lanes
    return xf.reshape(rows, lanes), tf.reshape(rows, lanes), rows, lanes


def _pick_block_rows(rows, lanes):
    target = max(8, _TARGET_BLOCK_ELEMS // lanes)
    if rows <= target:
        return rows                 # full-array dim: always a legal block dim
    return (target // 8) * 8        # multiple of 8 (also multiple of 16 here)


def _num_tensorcores():
    """2 on v7x (two TensorCores behind one JAX device), else 1 (v5e/v6e)."""
    try:
        kind = jax.devices()[0].device_kind.lower()
    except Exception:  # pragma: no cover - defensive
        return 1
    return 2 if "v7" in kind else 1


class RegLoss:
    """JAX/Pallas re-implementation of semilearn RegLoss forward."""

    loss_list = ["l2_loss", "l1_loss", "focal_l1_loss", "focal_l2_loss", "huber_loss"]

    def __init__(self, mode="l1_loss", **kwargs):
        assert mode in self.loss_list
        self.mode = mode
        # TODO(synk): semilearn hard-codes huber beta=1.0 and focal beta=0.2,
        # gamma=1.0 (activate='sigmoid'); extra **kwargs are accepted but ignored,
        # matching the reference module's defaults.

    def _tail_loss(self, x_tail, t_tail):
        d = x_tail.astype(jnp.float32) - t_tail.astype(jnp.float32)
        return _elementwise_loss(d, self.mode)

    def __call__(self, logits, targets, reduction="mean"):
        if logits.shape != targets.shape:
            assert targets.size == logits.size
            targets = targets.reshape(logits.shape)

        if reduction not in ("mean", "sum", "none"):
            raise ValueError(f"unsupported reduction: {reduction}")

        n = logits.size
        n_tail = n % _LANE
        n_aligned = n - n_tail

        # Tiny inputs (< one lane): no kernel, trivial jnp path.
        if n_aligned == 0:
            elem = self._tail_loss(logits, targets)
            if reduction == "mean":
                return jnp.mean(elem)
            if reduction == "sum":
                return jnp.sum(elem)
            return elem.astype(logits.dtype).reshape(logits.shape)

        x2d, t2d, rows, lanes = _flatten_aligned(logits, targets, n_aligned)
        block_rows = _pick_block_rows(rows, lanes)
        num_blocks = pl.cdiv(rows, block_rows)

        # Mandatory once blocks grow: 2 inputs x 2 pipeline buffers x ~4 MiB
        # = 16 MiB, exactly the v5e default scoped-VMEM budget; 32 MiB still
        # leaves headroom on v7x (64 MiB physical VMEM).
        cparams_common = dict(vmem_limit_bytes=32 * 1024 * 1024)
        in_bytes = n_aligned * (x2d.dtype.itemsize + t2d.dtype.itemsize)
        transc = n_aligned if self.mode.startswith("focal") else 0

        if reduction == "none":
            cost = pl.CostEstimate(
                flops=6 * n_aligned,
                transcendentals=transc,
                bytes_accessed=in_bytes + n_aligned * logits.dtype.itemsize)
            out2d = pl.pallas_call(
                functools.partial(_elementwise_kernel, mode=self.mode),
                out_shape=jax.ShapeDtypeStruct((rows, lanes), logits.dtype),
                grid_spec=pltpu.PrefetchScalarGridSpec(
                    num_scalar_prefetch=0,
                    grid=(num_blocks,),
                    # pipeline_mode=pl.Buffered(3) is an option if xprof shows
                    # DMA gaps at step boundaries; default double-buffering kept.
                    in_specs=[pl.BlockSpec((block_rows, lanes), lambda i: (i, 0)),
                              pl.BlockSpec((block_rows, lanes), lambda i: (i, 0))],
                    out_specs=pl.BlockSpec((block_rows, lanes), lambda i: (i, 0)),
                ),
                compiler_params=pltpu.CompilerParams(
                    dimension_semantics=("parallel",), **cparams_common),
                cost_estimate=cost,
            )(x2d, t2d)
            flat = out2d.reshape(-1)
            if n_tail:
                tail = self._tail_loss(
                    logits.reshape(-1)[n_aligned:],
                    targets.reshape(-1)[n_aligned:]).astype(logits.dtype)
                flat = jnp.concatenate([flat, tail])
            return flat.reshape(logits.shape)

        scale = 1.0 / float(n) if reduction == "mean" else 1.0

        # Core split: only where there are really 2 TensorCores (v7x) and
        # enough blocks to share; on v5e/v6e it would only add clamp/mask work.
        num_splits = _num_tensorcores() if num_blocks >= 4 else 1
        if num_splits > 1 and num_blocks % num_splits != 0:
            # Re-pick block_rows so the block count divides evenly across the
            # cores (avoids one core running a clamped duplicate block).
            alt = ((pl.cdiv(rows, num_blocks + 1) + 7) // 8) * 8
            if alt >= 8 and pl.cdiv(rows, alt) % num_splits == 0:
                block_rows = alt
                num_blocks = pl.cdiv(rows, alt)
        steps_per_split = pl.cdiv(num_blocks, num_splits)
        need_mask = num_splits * steps_per_split * block_rows > rows
        last_block = num_blocks - 1

        def in_map(s, i):
            # Clamp the (rare) fully-out-of-range logical block; the in-kernel
            # row mask zeros its contribution.
            return (jnp.minimum(s * steps_per_split + i, last_block), 0)

        kernel = functools.partial(
            _reduce_kernel, mode=self.mode, rows=rows, block_rows=block_rows,
            steps_per_split=steps_per_split, need_mask=need_mask)

        cost = pl.CostEstimate(
            flops=6 * n_aligned,
            transcendentals=transc,
            bytes_accessed=in_bytes + num_splits * 8 * lanes * 4)

        # NOTE: single-pass f32 accumulation of squared terms (l2/focal_l2) can
        # lose precision for very large n (>~1e8); the per-lane / per-split
        # partials mitigate this.
        partials = pl.pallas_call(
            kernel,
            out_shape=jax.ShapeDtypeStruct((num_splits * 8, lanes), jnp.float32),
            grid_spec=pltpu.PrefetchScalarGridSpec(
                num_scalar_prefetch=0,
                grid=(num_splits, steps_per_split),
                in_specs=[pl.BlockSpec((block_rows, lanes), in_map),
                          pl.BlockSpec((block_rows, lanes), in_map)],
                out_specs=pl.BlockSpec((8, lanes), lambda s, i: (s, 0)),
            ),
            compiler_params=pltpu.CompilerParams(
                dimension_semantics=("parallel", "arbitrary"), **cparams_common),
            cost_estimate=cost,
        )(x2d, t2d)

        # Single tiny cross-lane/sublane reduce over the partials, plus the
        # (<128-element) ragged tail folded in on the wrapper side.
        total = jnp.sum(partials)
        if n_tail:
            total = total + jnp.sum(self._tail_loss(
                logits.reshape(-1)[n_aligned:], targets.reshape(-1)[n_aligned:]))
        return total * scale


if __name__ == "__main__":
    key = jax.random.PRNGKey(0)
    k1, k2, k3, k4 = jax.random.split(key, 4)

    def ref_loss(mode, logits, targets, reduction="mean"):
        d = logits.astype(jnp.float32) - targets.reshape(logits.shape).astype(jnp.float32)
        ad = jnp.abs(d)
        if mode == "l1_loss":
            e = ad
        elif mode == "l2_loss":
            e = d * d
        elif mode == "huber_loss":
            e = jnp.where(ad < 1.0, 0.5 * d * d, ad - 0.5)
        elif mode == "focal_l1_loss":
            e = ad * (2.0 * jax.nn.sigmoid(0.2 * ad) - 1.0)
        else:
            e = d * d * (2.0 * jax.nn.sigmoid(0.2 * ad) - 1.0)
        if reduction == "mean":
            return jnp.mean(e)
        if reduction == "sum":
            return jnp.sum(e)
        return e

    # Primary small case: logits NCHW (2, 4, 16, 16); flat targets exercise
    # the `targets.view(logits.shape)` branch.
    logits = jax.random.normal(k1, (2, 4, 16, 16), dtype=jnp.float32)
    targets = jax.random.normal(k2, (2 * 4 * 16 * 16,), dtype=jnp.float32)

    out = jax.block_until_ready(RegLoss("l1_loss")(logits, targets, reduction="mean"))
    assert jnp.allclose(out, ref_loss("l1_loss", logits, targets), rtol=1e-5, atol=1e-6), out

    for mode in ("l2_loss", "huber_loss", "focal_l1_loss", "focal_l2_loss"):
        got = jax.block_until_ready(RegLoss(mode)(logits, targets, reduction="mean"))
        want = ref_loss(mode, logits, targets, "mean")
        assert jnp.allclose(got, want, rtol=1e-5, atol=1e-6), (mode, got, want)

    got = jax.block_until_ready(RegLoss("l1_loss")(logits, targets, reduction="sum"))
    assert jnp.allclose(got, ref_loss("l1_loss", logits, targets, "sum"), rtol=1e-5, atol=1e-4)

    got = jax.block_until_ready(RegLoss("l1_loss")(logits, targets, reduction="none"))
    assert got.shape == logits.shape
    assert jnp.allclose(got, ref_loss("l1_loss", logits, targets, "none"), rtol=1e-5, atol=1e-6)

    # Moderate case: single large lane-dense block (800 x 1024).
    logits_b = jax.random.normal(k3, (2, 16, 160, 160), dtype=jnp.float32)
    targets_b = jax.random.normal(k4, (2, 16, 160, 160), dtype=jnp.float32)
    got = jax.block_until_ready(RegLoss("l1_loss")(logits_b, targets_b, reduction="mean"))
    want = ref_loss("l1_loss", logits_b, targets_b, "mean")
    assert jnp.allclose(got, want, rtol=1e-5, atol=1e-5), (got, want)

    # Larger case exercising multi-step accumulation, the ragged-tail row mask
    # (num_blocks * block_rows > rows), and the core split on 2-TC chips.
    logits_d = jax.random.normal(k3, (4, 16, 256, 260), dtype=jnp.float32)
    targets_d = jax.random.normal(k4, (4, 16, 256, 260), dtype=jnp.float32)
    got = jax.block_until_ready(RegLoss("l1_loss")(logits_d, targets_d, reduction="mean"))
    want = ref_loss("l1_loss", logits_d, targets_d, "mean")
    assert jnp.allclose(got, want, rtol=1e-4, atol=1e-5), (got, want)

    # Ragged element count (n % 128 != 0): aligned-prefix kernel + jnp tail fold.
    logits_c = jax.random.normal(k3, (3, 5, 7, 11), dtype=jnp.float32)
    targets_c = jax.random.normal(k4, (3, 5, 7, 11), dtype=jnp.float32)
    got = jax.block_until_ready(RegLoss("l2_loss")(logits_c, targets_c, reduction="mean"))
    want = ref_loss("l2_loss", logits_c, targets_c, "mean")
    assert jnp.allclose(got, want, rtol=1e-5, atol=1e-6), (got, want)
    got = jax.block_until_ready(RegLoss("l1_loss")(logits_c, targets_c, reduction="none"))
    assert got.shape == logits_c.shape
    want = ref_loss("l1_loss", logits_c, targets_c, "none")
    assert jnp.allclose(got, want, rtol=1e-5, atol=1e-6)

    print("KERNEL_OK")
</pallas_src>

<mosaic_0001>
module attributes {stable_mosaic.version = 11 : i64} {
  func.func @_reduce_kernel(%arg0: i32, %arg1: i32, %arg2: memref<2x1024xf32, #tpu.memory_space<vmem>>, %arg3: memref<2x1024xf32, #tpu.memory_space<vmem>>, %arg4: memref<8x1024xf32, #tpu.memory_space<vmem>>) attributes {dimension_semantics = [#tpu.dimension_semantics<parallel>, #tpu.dimension_semantics<arbitrary>], iteration_bounds = array<i64: 1, 1>, scalar_prefetch = 0 : i64, scratch_operands = 0 : i64, tpu.core_type = #tpu.core_type<tc>, window_params = [{transform_indices = @transform_0, window_bounds = array<i64: 2, 1024>}, {transform_indices = @transform_1, window_bounds = array<i64: 2, 1024>}, {transform_indices = @transform_2, window_bounds = array<i64: 8, 1024>}]} {
    %c0_i32 = arith.constant 0 : i32
    %0 = arith.cmpi eq, %arg1, %c0_i32 : i32
    %1 = arith.extui %0 : i1 to i32
    %c0_i32_0 = arith.constant 0 : i32
    %2 = arith.cmpi ne, %1, %c0_i32_0 : i32
    scf.if %2 {
      %cst_8 = arith.constant 0.000000e+00 : f32
      %12 = vector.broadcast %cst_8 : f32 to vector<8x1024xf32>
      %c0_9 = arith.constant 0 : index
      %c0_10 = arith.constant 0 : index
      %13 = vector.load %arg4[%c0_9, %c0_10] : memref<8x1024xf32, #tpu.memory_space<vmem>>, vector<8x1024xf32>
      tpu.vector_store %arg4[%c0_9, %c0_10], %12 {strides = array<i32>} : memref<8x1024xf32, #tpu.memory_space<vmem>>, vector<8x1024xf32>,
    } else {
    }
    %c0 = arith.constant 0 : index
    %c0_1 = arith.constant 0 : index
    %3 = vector.load %arg2[%c0, %c0_1] : memref<2x1024xf32, #tpu.memory_space<vmem>>, vector<2x1024xf32>
    %c0_2 = arith.constant 0 : index
    %c0_3 = arith.constant 0 : index
    %4 = vector.load %arg3[%c0_2, %c0_3] : memref<2x1024xf32, #tpu.memory_space<vmem>>, vector<2x1024xf32>
    %5 = arith.subf %3, %4 : vector<2x1024xf32>
    %6 = math.absf %5 : vector<2x1024xf32>
    %c0_4 = arith.constant 0 : index
    %c0_5 = arith.constant 0 : index
    %7 = vector.load %arg4[%c0_4, %c0_5] : memref<8x1024xf32, #tpu.memory_space<vmem>>, vector<1x1024xf32>
    %cst = arith.constant dense<0.000000e+00> : vector<1024xf32>
    %8 = vector.multi_reduction <add>, %6, %cst [0] : vector<2x1024xf32> to vector<1024xf32>
    %9 = vector.shape_cast %8 : vector<1024xf32> to vector<1x1024xf32>
    %10 = arith.addf %7, %9 : vector<1x1024xf32>
    %c0_6 = arith.constant 0 : index
    %c0_7 = arith.constant 0 : index
    %11 = vector.load %arg4[%c0_6, %c0_7] : memref<8x1024xf32, #tpu.memory_space<vmem>>, vector<1x1024xf32>
    tpu.vector_store %arg4[%c0_6, %c0_7], %10 {strides = array<i32>} : memref<8x1024xf32, #tpu.memory_space<vmem>>, vector<1x1024xf32>,
    return
  }
  func.func @transform_0(%arg0: i32, %arg1: i32) -> (i32, i32) {
    %c1_i32 = arith.constant 1 : i32
    %0 = arith.muli %arg0, %c1_i32 : i32
    %1 = arith.addi %0, %arg1 : i32
    %c0_i32 = arith.constant 0 : i32
    %2 = arith.minsi %1, %c0_i32 : i32
    %c0_i32_0 = arith.constant 0 : i32
    %c0_i32_1 = arith.constant 0 : i32
    return %2, %c0_i32_0 : i32, i32
  }
  func.func @transform_1(%arg0: i32, %arg1: i32) -> (i32, i32) {
    %c1_i32 = arith.constant 1 : i32
    %0 = arith.muli %arg0, %c1_i32 : i32
    %1 = arith.addi %0, %arg1 : i32
    %c0_i32 = arith.constant 0 : i32
    %2 = arith.minsi %1, %c0_i32 : i32
    %c0_i32_0 = arith.constant 0 : i32
    %c0_i32_1 = arith.constant 0 : i32
    return %2, %c0_i32_0 : i32, i32
  }
  func.func @transform_2(%arg0: i32, %arg1: i32) -> (i32, i32) {
    %c0_i32 = arith.constant 0 : i32
    %c0_i32_0 = arith.constant 0 : i32
    return %arg0, %c0_i32 : i32, i32
  }
}

</mosaic_0001>

<llo_original>
// kernel: tpu_custom_call.1
$region0: #{tpu_custom_call.1}
  #allocation0 [shape = 'u32[]', space=smem, size = 0x4, offset = 0x4, fixed_abs, tag = 'smem constant byte address 0x4 - core index']
  #allocation1 [shape = 'u32[144,128]{1,0:T(1,128)}', space=vmem, size = 0x12000, scoped, tag = 'internal scratch']
  %s0 = inlined_call_operand.hbm [shape: f32[2,1024], index: 0, kind: input, shape index: {}]
  %s1 = inlined_call_operand.hbm [shape: f32[2,1024], index: 1, kind: input, shape index: {}]
  %s2 = inlined_call_operand.hbm [shape: f32[8,1024], index: 2, kind: output, shape index: {}]
  %s3 = sld [smem:[#allocation0]]
  $region30: #{tpu_custom_call.1} parent=0
    _
  %s5 = ssub.s32 1, %s3
  %s6 = scalar_select 0, %s5, %s3
  $region1: #{tpu_custom_call.1} parent=0
    #allocation2 [shape = 'u8[8192]{0}', space=vmem, size = 0x2000, scoped, tag = 'input window, operand 0, single buffered']
    #allocation3 [shape = 's32[1]{0}', space=sflag, size = 0x4, scoped, tag = 'scoped memory for tpu_custom_call.1']
    #allocation4 [shape = 's32[1]{0}', space=sflag, size = 0x4, scoped, tag = 'scoped memory for tpu_custom_call.1']
    #allocation5 [shape = 'u8[8192]{0}', space=vmem, size = 0x2000, scoped, tag = 'input window, operand 1, single buffered']
    #allocation6 [shape = 's32[1]{0}', space=sflag, size = 0x4, scoped, tag = 'scoped memory for tpu_custom_call.1']
    #allocation7 [shape = 'u8[32768]{0}', space=vmem, size = 0x8000, scoped, tag = 'output window, operand 0, single buffered']
    %7 = vsyncpa [#allocation3], 0
    %8 = vsyncpa [#allocation6], 0
    %9 = vsyncpa [#allocation4], 0
    // Predicated region
    $region2: #{tpu_custom_call.1} parent=1 // pred_check
      _
    $region3: #{tpu_custom_call.1} parent=1 // pred_check_branch
      %11 = sbr.rel (0) target = $region5
    $region4: #{tpu_custom_call.1} parent=1 // pred_region
      %s12 = sadd.s32 0, 0
      %p13 = scmp.lt.s32.totalorder %s12, 0
      %s14 = scalar_select %p13, %s12, 0
      %s16 = ssub.s32 256, 256
      %17 = vsyncadd [#allocation3], %s16
      %s18 = smul.addr %s14, 8
      %s19 = smul.addr %s18, 32
      %s20 = scalar_lea.hbm %s0, %s19
      %s22 = sshll.u32 [#allocation2], 4
      %s23 = int_to_ptr.vmem [resolvable:$true] %s22
      %25 = dma.hbm_to_vmem [thread:$0]  %s20, 256, %s23, [#allocation3]
    $region5: #{tpu_custom_call.1} parent=1 // pred_fallthru
      _
    // Predicated region
    $region6: #{tpu_custom_call.1} parent=1 // pred_check
      _
    $region7: #{tpu_custom_call.1} parent=1 // pred_check_branch
      %27 = sbr.rel (0) target = $region9
    $region8: #{tpu_custom_call.1} parent=1 // pred_region
      %s28 = sadd.s32 0, 0
      %p29 = scmp.lt.s32.totalorder %s28, 0
      %s30 = scalar_select %p29, %s28, 0
      %s32 = ssub.s32 256, 256
      %33 = vsyncadd [#allocation6], %s32
      %s34 = smul.addr %s30, 8
      %s35 = smul.addr %s34, 32
      %s36 = scalar_lea.hbm %s1, %s35
      %s38 = sshll.u32 [#allocation5], 4
      %s39 = int_to_ptr.vmem [resolvable:$true] %s38
      %41 = dma.hbm_to_vmem [thread:$0]  %s36, 256, %s39, [#allocation6]
    $region9: #{tpu_custom_call.1} parent=1 // pred_fallthru
      _
    // Predicated region
    $region10: #{tpu_custom_call.1} parent=1 // pred_check
      _
    $region11: #{tpu_custom_call.1} parent=1 // pred_check_branch
      %43 = sbr.rel (0) target = $region13
    $region12: #{tpu_custom_call.1} parent=1 // pred_region
      %44 = dma.done [#allocation3], 256
    $region13: #{tpu_custom_call.1} parent=1 // pred_fallthru
      _
    // Predicated region
    $region14: #{tpu_custom_call.1} parent=1 // pred_check
      _
    $region15: #{tpu_custom_call.1} parent=1 // pred_check_branch
      %46 = sbr.rel (0) target = $region17
    $region16: #{tpu_custom_call.1} parent=1 // pred_region
      %47 = dma.done [#allocation6], 256
    $region17: #{tpu_custom_call.1} parent=1 // pred_fallthru
      _
    %s48 = sadd.s32 0, 0
    %p49 = scmp.lt.s32.totalorder %s48, 0
    %s50 = scalar_select %p49, %s48, 0
    %s51 = sadd.s32 0, 0
    %p52 = scmp.lt.s32.totalorder %s51, 0
    %s53 = scalar_select %p52, %s51, 0
    %p54 = scmp.eq.s32.totalorder 0, 0
    // Predicated region
    $region18: #{tpu_custom_call.1} parent=1 // pred_check
      %p55 = pneg %p54
    $region19: #{tpu_custom_call.1} parent=1 // pred_check_branch
      %57 = sbr.rel (%p55) target = $region21
    $region20: #{tpu_custom_call.1} parent=1 // pred_region
      %58 = vst [vmem:[#allocation7] sm:$0xff] 0.0
      %59 = vst [vmem:[#allocation7 + $0x8] sm:$0xff] 0.0
      %60 = vst [vmem:[#allocation7 + $0x10] sm:$0xff] 0.0
      %61 = vst [vmem:[#allocation7 + $0x18] sm:$0xff] 0.0
      %62 = vst [vmem:[#allocation7 + $0x20] sm:$0xff] 0.0
      %63 = vst [vmem:[#allocation7 + $0x28] sm:$0xff] 0.0
      %64 = vst [vmem:[#allocation7 + $0x30] sm:$0xff] 0.0
      %65 = vst [vmem:[#allocation7 + $0x38] sm:$0xff] 0.0
    $region21: #{tpu_custom_call.1} parent=1 // pred_fallthru
      _
    %v66 = vld [vmem:[#allocation2] sm:$0xff]
    %v67 = vld [vmem:[#allocation2 + $0x8] sm:$0xff]
    %v68 = vld [vmem:[#allocation5] sm:$0xff]
    %v69 = vld [vmem:[#allocation5 + $0x8] sm:$0xff]
    %v70 = vsub.f32 %v66, %v68
    %v71 = vsub.f32 %v67, %v69
    %v72 = vand.u32 2147483647, %v70
    %v73 = vand.u32 2147483647, %v71
    %v74 = vld [vmem:[#allocation7] ss:$8 sm:$0xf]
    %v75 = vld [vmem:[#allocation7] ss:$8 sm:$0xf0]
    %v76 = vor.u32 %v74, %v75
    %v79 = vcombine.high %v72, %v72
    %v81 = vunpack.c.l.s4 1983009808
    %v82 = vunpack.c.0.s8 %v81
    %v83 = vlaneseq
    %v84 = vshrl.u32 %v83, 7
    %v85 = vsub.s32 %v82, %v84
    %v86 = vrot.slane %v72, %v85
    %v88 = vunpack.c.l.s4 1983009808
    %v89 = vunpack.c.0.s8 %v88
    %v90 = vlaneseq
    %v91 = vshrl.u32 %v90, 7
    %v92 = vsub.s32 %v89, %v91
    %v93 = vrot.slane %v79, %v92
    %v94 = vcombine.high %v86, %v86
    %v95 = vcombine.high %v93, %v93
    %v96 = vcombine.high %v73, %v73
    %v98 = vunpack.c.l.s4 1983009808
    %v99 = vunpack.c.0.s8 %v98
    %v100 = vlaneseq
    %v101 = vshrl.u32 %v100, 7
    %v102 = vsub.s32 %v99, %v101
    %v103 = vrot.slane %v73, %v102
    %v105 = vunpack.c.l.s4 1983009808
    %v106 = vunpack.c.0.s8 %v105
    %v107 = vlaneseq
    %v108 = vshrl.u32 %v107, 7
    %v109 = vsub.s32 %v106, %v108
    %v110 = vrot.slane %v96, %v109
    %v111 = vcombine.high %v103, %v103
    %v112 = vcombine.high %v110, %v110
    %vm121 = vcmask 1041408
    %v122 = vsel %vm121, %v86, 0.0
    %v123 = vrot.slane %v122, 4
    %v124 = vadd.f32 %v122, %v123
    %v125 = vrot.slane %v124, 2
    %v126 = vadd.f32 %v124, %v125
    %v127 = vrot.slane %v126, 1
    %v128 = vadd.f32 %v126, %v127
    %v129 = vsel %vm121, %v94, 0.0
    %v130 = vrot.slane %v129, 4
    %v131 = vadd.f32 %v129, %v130
    %v132 = vrot.slane %v131, 2
    %v133 = vadd.f32 %v131, %v132
    %v134 = vrot.slane %v133, 1
    %v135 = vadd.f32 %v133, %v134
    %v136 = vsel %vm121, %v93, 0.0
    %v137 = vrot.slane %v136, 4
    %v138 = vadd.f32 %v136, %v137
    %v139 = vrot.slane %v138, 2
    %v140 = vadd.f32 %v138, %v139
    %v141 = vrot.slane %v140, 1
    %v142 = vadd.f32 %v140, %v141
    %v143 = vsel %vm121, %v95, 0.0
    %v144 = vrot.slane %v143, 4
    %v145 = vadd.f32 %v143, %v144
    %v146 = vrot.slane %v145, 2
    %v147 = vadd.f32 %v145, %v146
    %v148 = vrot.slane %v147, 1
    %v149 = vadd.f32 %v147, %v148
    %v150 = vsel %vm121, %v103, 0.0
    %v151 = vrot.slane %v150, 4
    %v152 = vadd.f32 %v150, %v151
    %v153 = vrot.slane %v152, 2
    %v154 = vadd.f32 %v152, %v153
    %v155 = vrot.slane %v154, 1
    %v156 = vadd.f32 %v154, %v155
    %v157 = vsel %vm121, %v111, 0.0
    %v158 = vrot.slane %v157, 4
    %v159 = vadd.f32 %v157, %v158
    %v160 = vrot.slane %v159, 2
    %v161 = vadd.f32 %v159, %v160
    %v162 = vrot.slane %v161, 1
    %v163 = vadd.f32 %v161, %v162
    %v164 = vsel %vm121, %v110, 0.0
    %v165 = vrot.slane %v164, 4
    %v166 = vadd.f32 %v164, %v165
    %v167 = vrot.slane %v166, 2
    %v168 = vadd.f32 %v166, %v167
    %v169 = vrot.slane %v168, 1
    %v170 = vadd.f32 %v168, %v169
    %v171 = vsel %vm121, %v112, 0.0
    %v172 = vrot.slane %v171, 4
    %v173 = vadd.f32 %v171, %v172
    %v174 = vrot.slane %v173, 2
    %v175 = vadd.f32 %v173, %v174
    %v176 = vrot.slane %v175, 1
    %v177 = vadd.f32 %v175, %v176
    %v186 = vcombine.low %v128, %v135
    %v187 = vcombine.low %v142, %v149
    %v188 = vcombine.low %v156, %v163
    %v189 = vcombine.low %v170, %v177
    %v191 = vunpack.c.l.s4 1966171168
    %v192 = vunpack.c.0.s8 %v191
    %v193 = vlaneseq
    %v194 = vshrl.u32 %v193, 7
    %v195 = vsub.s32 %v192, %v194
    %v196 = vrot.slane %v186, %v195
    %v198 = vunpack.c.l.s4 1966171168
    %v199 = vunpack.c.0.s8 %v198
    %v200 = vlaneseq
    %v201 = vshrl.u32 %v200, 7
    %v202 = vsub.s32 %v199, %v201
    %v203 = vrot.slane %v187, %v202
    %v205 = vunpack.c.l.s4 1966171168
    %v206 = vunpack.c.0.s8 %v205
    %v207 = vlaneseq
    %v208 = vshrl.u32 %v207, 7
    %v209 = vsub.s32 %v206, %v208
    %v210 = vrot.slane %v188, %v209
    %v212 = vunpack.c.l.s4 1966171168
    %v213 = vunpack.c.0.s8 %v212
    %v214 = vlaneseq
    %v215 = vshrl.u32 %v214, 7
    %v216 = vsub.s32 %v213, %v215
    %v217 = vrot.slane %v189, %v216
    %v218 = vcombine.low %v196, %v203
    %v219 = vcombine.low %v210, %v217
    %v221 = vunpack.c.l.s4 1966171168
    %v222 = vunpack.c.0.s8 %v221
    %v223 = vlaneseq
    %v224 = vshrl.u32 %v223, 7
    %v225 = vsub.s32 %v222, %v224
    %v226 = vrot.slane %v218, %v225
    %v228 = vunpack.c.l.s4 1966171168
    %v229 = vunpack.c.0.s8 %v228
    %v230 = vlaneseq
    %v231 = vshrl.u32 %v230, 7
    %v232 = vsub.s32 %v229, %v231
    %v233 = vrot.slane %v219, %v232
    %v234 = vcombine.low %v226, %v233
    %v236 = vadd.f32 %v76, %v234
    %237 = vst [vmem:[#allocation7] ss:$8 sm:$0xf] %v236
    %238 = vst [vmem:[#allocation7] ss:$8 sm:$0xf0] %v236
    // Predicated region
    $region22: #{tpu_custom_call.1} parent=1 // pred_check
      _
    $region23: #{tpu_custom_call.1} parent=1 // pred_check_branch
      %240 = sbr.rel (0) target = $region25
    $region24: #{tpu_custom_call.1} parent=1 // pred_region
      %s242 = ssub.s32 1024, 1024
      %243 = vsyncadd [#allocation4], %s242
      %s245 = sshll.u32 [#allocation7], 4
      %s246 = int_to_ptr.vmem [resolvable:$true] %s245
      %248 = dma.vmem_to_hbm [thread:$0]  %s246, 1024, %s2, [#allocation4]
    $region25: #{tpu_custom_call.1} parent=1 // pred_fallthru
      _
    // Predicated region
    $region26: #{tpu_custom_call.1} parent=1 // pred_check
      _
    $region27: #{tpu_custom_call.1} parent=1 // pred_check_branch
      %250 = sbr.rel (0) target = $region29
    $region28: #{tpu_custom_call.1} parent=1 // pred_region
      %251 = dma.done [#allocation4], 1024
    $region29: #{tpu_custom_call.1} parent=1 // pred_fallthru
      _
    %252 = vsyncpa [#allocation3], 1
    %253 = vsyncpa [#allocation6], 1
    %254 = vsyncpa [#allocation4], 1

</llo_original>
